<compile_context>
chip_gen: v6e
topology: v6e:2x2x1
jax: 0.10.0
libtpu: 0.0.40
codegen_flags: <defaults>
</compile_context>

<pallas_src>
import functools
import math

import jax
import jax.numpy as jnp
from jax.experimental import pallas as pl
from jax.experimental.pallas import tpu as pltpu


_TARGET_TILE_BYTES = 4 * 1024 * 1024  # ~4 MiB per tile; 4 pipeline buffers << 32 MiB scoped VMEM


def _cdiv(a, b):
    return -(-a // b)


def _logit_mask_kernel(x_ref, o_ref, *, vocab_size, full_v, v_start, wb):
    """x_ref / o_ref: VMEM (TB, D, WB) tile covering vocab columns
    [v_start + j*wb, v_start + (j+1)*wb) where j = pl.program_id(1)."""
    _, d, w = x_ref.shape
    col_off = jnp.int32(v_start) + pl.program_id(1) * jnp.int32(wb)
    col = jax.lax.broadcasted_iota(jnp.int32, (d, w), 1) + col_off
    row = jax.lax.broadcasted_iota(jnp.int32, (d, w), 0)
    # Per-depth threshold from the *static* vocab_size; default V == "never mask".
    thr = jnp.full((d, w), jnp.int32(full_v), dtype=jnp.int32)
    for depth, vs in enumerate(vocab_size):
        if vs < full_v:
            thr = jnp.where(row == depth, jnp.int32(vs), thr)
    oob = col >= thr
    neg_inf = jnp.array(-jnp.inf, dtype=x_ref.dtype)
    o_ref[...] = jnp.where(oob[None, :, :], neg_inf, x_ref[...])


def logit_mask(logits: jax.Array, vocab_size, *, block_b: int | None = None) -> jax.Array:
    """Pallas implementation of LogitMask.forward.

    logits: [B, D, V] float array, D == len(vocab_size).
    block_b: optional batch-tile override (mainly for testing).
    """
    vocab_size = tuple(int(v) for v in vocab_size)
    assert logits.ndim == 3, logits.shape
    B, D, V = logits.shape
    assert D == len(vocab_size), (D, len(vocab_size))
    assert jnp.issubdtype(logits.dtype, jnp.floating), "LogitMask expects float logits"

    # Static fast paths (mirror the module's mask_cond + "nothing to mask").
    if list((vocab_size[0],) * D) == list(vocab_size):
        return logits
    if all(vs >= V for vs in vocab_size):
        return logits

    itemsize = logits.dtype.itemsize
    min_masked = min(vs for vs in vocab_size if vs < V)

    # ---- vocab-axis window + column block size ----------------------------
    if V % 128 == 0:
        v_start128 = (min_masked // 128) * 128
        anchor = v_start128 if v_start128 > 0 else V
        g = math.gcd(anchor, V)                      # multiple of 128, divides V
        max_row_bytes = max(1, _TARGET_TILE_BYTES // min(8, max(1, B)))
        max_cols = max(128, max_row_bytes // max(1, D * itemsize))
        wb = 128                                     # always valid: 128 | g | V
        c = 256
        while c <= min(g, max_cols):
            if g % c == 0:
                wb = c
            c += 128
        v_start = (min_masked // wb) * wb            # wb | v_start and wb | V
    else:
        # V is not lane aligned: the block must span the full vocab axis.
        # TODO(synk): pad-or-split support for huge V that is not a multiple of 128.
        wb = V
        v_start = 0
    nv = (V - v_start) // wb
    v0_blk = v_start // wb

    # ---- batch block size --------------------------------------------------
    row_bytes = D * wb * itemsize
    if block_b is not None:
        tb = max(1, min(int(block_b), B))
    else:
        tb = max(1, _TARGET_TILE_BYTES // row_bytes)
        tb = min(tb, B)
        if tb >= 8:
            tb = (tb // 8) * 8       # round down only; never force tiny batches up to 8
    nb = _cdiv(B, tb)
    # Keep at least 2 grid steps when possible so v7x's 2 TCs both get work.
    while block_b is None and nb * nv < 2 and tb > 1:
        tb = _cdiv(tb, 2)
        nb = _cdiv(B, tb)

    kernel = functools.partial(
        _logit_mask_kernel, vocab_size=vocab_size, full_v=V, v_start=v_start, wb=wb)

    spec = pl.BlockSpec((tb, D, wb), lambda i, j: (i, 0, v0_blk + j))
    return pl.pallas_call(
        kernel,
        out_shape=jax.ShapeDtypeStruct((B, D, V), logits.dtype),
        grid=(nb, nv),
        in_specs=[spec],
        out_specs=spec,
        # Alias logits -> output: columns below the window are never streamed
        # through the kernel and keep their original values (in place when the
        # input is donated; XLA inserts a safe copy otherwise).
        input_output_aliases={0: 0},
        compiler_params=pltpu.CompilerParams(
            dimension_semantics=("parallel", "parallel"),
            vmem_limit_bytes=32 * 1024 * 1024,
        ),
    )(logits)


def _reference(logits, vocab_size):
    # Pure-JAX reference mirroring the PyTorch forward.
    vocab_size = tuple(int(v) for v in vocab_size)
    if list((vocab_size[0],) * len(vocab_size)) == list(vocab_size):
        return logits
    B, D, V = logits.shape
    out = logits
    col = jnp.arange(V)
    for idx, vs in enumerate(vocab_size):
        row = jnp.where(col >= vs, -jnp.inf, out[:, idx, :])
        out = out.at[:, idx, :].set(row)
    return out


def _check(out, ref):
    ok = jnp.where(
        jnp.isinf(ref),
        jnp.isinf(out) & (out < 0),
        jnp.abs(out - ref) < 1e-6,
    )
    return bool(jnp.all(ok))


if __name__ == "__main__":
    key = jax.random.PRNGKey(0)

    # Case 1: small shapes consistent with the module: batch=2, depth=4, V=16.
    B, D, V = 2, 4, 16
    vocab_size = (16, 12, 10, 8)  # unequal -> masking path exercised (V not lane aligned)
    logits = jax.random.normal(key, (B, D, V), dtype=jnp.float32)
    ref = _reference(logits, vocab_size)
    out = jax.block_until_ready(logit_mask(logits, vocab_size))
    assert out.shape == logits.shape and out.dtype == logits.dtype
    assert _check(out, ref), "Pallas output mismatch vs reference (case 1)"

    # Case 2: lane-aligned V, column-window restriction (v_start=128), a depth
    # with nothing to mask, non-divisible batch, explicit batch-tile override.
    key2 = jax.random.PRNGKey(1)
    B2, D2, V2 = 20, 4, 256
    vocab_size2 = (256, 200, 130, 256)
    logits2 = jax.random.normal(key2, (B2, D2, V2), dtype=jnp.float32)
    ref2 = _reference(logits2, vocab_size2)
    out2 = jax.block_until_ready(logit_mask(logits2, vocab_size2, block_b=8))
    assert _check(out2, ref2), "Pallas output mismatch vs reference (case 2)"
    out2b = jax.block_until_ready(logit_mask(logits2, vocab_size2))  # default tiling path
    assert _check(out2b, ref2), "Pallas output mismatch vs reference (case 2, auto tiles)"

    # Case 3: wider lane-aligned window with wb > 128 (wb=256, v_start=256).
    key3 = jax.random.PRNGKey(2)
    B3, D3, V3 = 4, 4, 512
    vocab_size3 = (512, 300, 256, 512)
    logits3 = jax.random.normal(key3, (B3, D3, V3), dtype=jnp.float32)
    ref3 = _reference(logits3, vocab_size3)
    out3 = jax.block_until_ready(logit_mask(logits3, vocab_size3))
    assert _check(out3, ref3), "Pallas output mismatch vs reference (case 3)"

    # Case 4: no-op path (all vocab sizes equal) bypasses the kernel.
    out_same = jax.block_until_ready(logit_mask(logits, (16, 16, 16, 16)))
    assert bool(jnp.all(out_same == logits))

    print("KERNEL_OK")
</pallas_src>

<mosaic_0001>
module attributes {stable_mosaic.version = 11 : i64} {
  func.func @_logit_mask_kernel(%arg0: i32, %arg1: i32, %arg2: memref<1x4x16xf32, #tpu.memory_space<vmem>>, %arg3: memref<1x4x16xf32, #tpu.memory_space<vmem>>) attributes {dimension_semantics = [#tpu.dimension_semantics<parallel>, #tpu.dimension_semantics<parallel>], iteration_bounds = array<i64: 2, 1>, scalar_prefetch = 0 : i64, scratch_operands = 0 : i64, tpu.core_type = #tpu.core_type<tc>, window_params = [{transform_indices = @transform_0, window_bounds = array<i64: 1, 4, 16>}, {transform_indices = @transform_1, window_bounds = array<i64: 1, 4, 16>}]} {
    %c16_i32 = arith.constant 16 : i32
    %0 = arith.muli %arg1, %c16_i32 : i32
    %c0_i32 = arith.constant 0 : i32
    %1 = arith.addi %c0_i32, %0 : i32
    %2 = tpu.iota {dimensions = array<i32: 1>} : vector<4x16xi32>
    %3 = vector.broadcast %1 : i32 to vector<4x16xi32>
    %4 = arith.addi %2, %3 : vector<4x16xi32>
    %5 = tpu.iota {dimensions = array<i32: 0>} : vector<4x16xi32>
    %c16_i32_0 = arith.constant 16 : i32
    %6 = vector.broadcast %c16_i32_0 : i32 to vector<4x16xi32>
    %c1_i32 = arith.constant 1 : i32
    %7 = vector.broadcast %c1_i32 : i32 to vector<4x16xi32>
    %8 = arith.cmpi eq, %5, %7 : vector<4x16xi32>
    %c12_i32 = arith.constant 12 : i32
    %9 = vector.broadcast %c12_i32 : i32 to vector<4x16xi32>
    %10 = arith.select %8, %9, %6 : vector<4x16xi1>, vector<4x16xi32>
    %c2_i32 = arith.constant 2 : i32
    %11 = vector.broadcast %c2_i32 : i32 to vector<4x16xi32>
    %12 = arith.cmpi eq, %5, %11 : vector<4x16xi32>
    %c10_i32 = arith.constant 10 : i32
    %13 = vector.broadcast %c10_i32 : i32 to vector<4x16xi32>
    %14 = arith.select %12, %13, %10 : vector<4x16xi1>, vector<4x16xi32>
    %c3_i32 = arith.constant 3 : i32
    %15 = vector.broadcast %c3_i32 : i32 to vector<4x16xi32>
    %16 = arith.cmpi eq, %5, %15 : vector<4x16xi32>
    %c8_i32 = arith.constant 8 : i32
    %17 = vector.broadcast %c8_i32 : i32 to vector<4x16xi32>
    %18 = arith.select %16, %17, %14 : vector<4x16xi1>, vector<4x16xi32>
    %19 = arith.cmpi sge, %4, %18 : vector<4x16xi32>
    %20 = vector.shape_cast %19 : vector<4x16xi1> to vector<1x4x16xi1>
    %c0 = arith.constant 0 : index
    %c0_1 = arith.constant 0 : index
    %c0_2 = arith.constant 0 : index
    %21 = vector.load %arg2[%c0, %c0_1, %c0_2] : memref<1x4x16xf32, #tpu.memory_space<vmem>>, vector<1x4x16xf32>
    %cst = arith.constant 0xFF800000 : f32
    %22 = vector.broadcast %cst : f32 to vector<1x4x16xf32>
    %23 = arith.select %20, %22, %21 : vector<1x4x16xi1>, vector<1x4x16xf32>
    %c0_3 = arith.constant 0 : index
    %c0_4 = arith.constant 0 : index
    %c0_5 = arith.constant 0 : index
    %24 = vector.load %arg3[%c0_3, %c0_4, %c0_5] : memref<1x4x16xf32, #tpu.memory_space<vmem>>, vector<1x4x16xf32>
    tpu.vector_store %arg3[%c0_3, %c0_4, %c0_5], %23 {strides = array<i32>} : memref<1x4x16xf32, #tpu.memory_space<vmem>>, vector<1x4x16xf32>,
    return
  }
  func.func @transform_0(%arg0: i32, %arg1: i32) -> (i32, i32, i32) {
    %c0_i32 = arith.constant 0 : i32
    %0 = arith.addi %c0_i32, %arg1 : i32
    %c0_i32_0 = arith.constant 0 : i32
    %c0_i32_1 = arith.constant 0 : i32
    return %arg0, %c0_i32_0, %0 : i32, i32, i32
  }
  func.func @transform_1(%arg0: i32, %arg1: i32) -> (i32, i32, i32) {
    %c0_i32 = arith.constant 0 : i32
    %0 = arith.addi %c0_i32, %arg1 : i32
    %c0_i32_0 = arith.constant 0 : i32
    %c0_i32_1 = arith.constant 0 : i32
    return %arg0, %c0_i32_0, %0 : i32, i32, i32
  }
}

</mosaic_0001>

<llo_original>
// kernel: tpu_custom_call.1
$region0: #{tpu_custom_call.1}
  #allocation0 [shape = 'u32[]', space=smem, size = 0x4, offset = 0x4, fixed_abs, tag = 'smem constant byte address 0x4 - core index']
  #allocation1 [shape = 'u32[144,128]{1,0:T(1,128)}', space=vmem, size = 0x12000, scoped, tag = 'internal scratch']
  %s0 = inlined_call_operand.hbm [shape: f32[2,4,16], index: 0, kind: input, shape index: {}, may-alias: {0,1}]
  %s1 = inlined_call_operand.hbm [shape: f32[2,4,16], index: 1, kind: output, shape index: {}, may-alias: {0,1}]
  %s2 = sld [smem:[#allocation0]]
  $region41: #{tpu_custom_call.1} parent=0
    _
  %s4 = ssub.s32 1, %s2
  %s5 = scalar_select 0, %s4, %s2
  $region1: #{tpu_custom_call.1} parent=0
    #allocation2 [shape = 'u8[4096]{0}', space=vmem, size = 0x1000, scoped, tag = 'input window, operand 0']
    #allocation3 [shape = 's32[2]{0}', space=sflag, size = 0x8, scoped, tag = 'scoped memory for tpu_custom_call.1']
    #allocation4 [shape = 's32[2]{0}', space=sflag, size = 0x8, scoped, tag = 'scoped memory for tpu_custom_call.1']
    #allocation5 [shape = 'u8[4096]{0}', space=vmem, size = 0x1000, scoped, tag = 'output window, operand 0']
    %6 = vsyncpa [#allocation3], 0
    %s7 = scalar_lea.sflag [#allocation3], 1
    %8 = vsyncpa %s7, 0
    %9 = vsyncpa [#allocation4], 0
    %s10 = scalar_lea.sflag [#allocation4], 1
    %11 = vsyncpa %s10, 0
    loop: start=0, step=1, limit=4
    $region2: #{tpu_custom_call.1} parent=1 // loop_pre_header
      _
    $region3: #{tpu_custom_call.1} parent=1 // loop_header
      %s13 = sphi 0, %s17
      %p14 = scmp.ge.s32.totalorder %s13, 4
      %s20 = sphi 0, %s32
      %s21 = sphi 0, %s28
      %s22 = sphi 0, %s20
      %s23 = sphi 0, %s21
      %s24 = sphi 0, %s22
      %s25 = sphi 0, %s23
      %s37 = sphi 0, %s39
      %s40 = sphi 0, %s37
      %s41 = sphi 0, %s40
      %s57 = sphi 0, %s41
      %s65 = sphi 0, %s67
      %s68 = sphi 0, %s65
      %s69 = sphi 0, %s68
      %s85 = sphi 0, %s69
    $region4: #{tpu_custom_call.1} parent=1 // loop_header_branch
      %16 = sbr.rel (%p14) target = $region8
    $region5: #{tpu_custom_call.1} parent=1 // loop_body
      %s18 = ssub.s32 %s13, 1
      %s19 = ssub.s32 %s13, 2
      %s26 = sadd.s32 1, %s21
      %p27 = scmp.ge.s32.totalorder %s26, 1
      %s28 = scalar_select %p27, 0, %s26
      %s29 = sadd.s32 1, %s20
      %s30 = scalar_select %p27, %s29, %s20
      %p31 = scmp.ge.s32.totalorder %s30, 2
      %s32 = scalar_select %p31, 0, %s30
      %s33 = ssub.s32 %s20, %s32
      %s34 = ssub.s32 %s21, %s28
      %s35 = sor.u32 %s33, %s34
      %p36 = scmp.eq.s32.totalorder %s35, 0
      %s38 = sadd.s32 %s37, 1
      %s39 = scalar_select %p36, %s37, %s38
      %p42 = pneg %p36
      %p43 = scmp.eq.s32.totalorder %s13, 1
      %p44 = por %p42, %p43
      %p45 = scmp.ne.s32.totalorder %s37, %s40
      %p46 = scmp.eq.s32.totalorder %s13, 0
      %p47 = por %p45, %p46
      %p48 = scmp.ne.s32.totalorder %s37, %s40
      %p49 = scmp.eq.s32.totalorder %s18, 1
      %p50 = por %p48, %p49
      %p51 = scmp.ne.s32.totalorder %s40, %s41
      %p52 = scmp.eq.s32.totalorder %s18, 0
      %p53 = por %p51, %p52
      %p54 = scmp.ne.s32.totalorder %s40, %s41
      %p55 = scmp.eq.s32.totalorder %s19, 1
      %p56 = por %p54, %p55
      %p58 = scmp.ne.s32.totalorder %s41, %s57
      %p59 = scmp.eq.s32.totalorder %s19, 0
      %p60 = por %p58, %p59
      %s61 = ssub.s32 %s20, %s32
      %s62 = ssub.s32 %s21, %s28
      %s63 = sor.u32 %s61, %s62
      %p64 = scmp.eq.s32.totalorder %s63, 0
      %s66 = sadd.s32 %s65, 1
      %s67 = scalar_select %p64, %s65, %s66
      %p70 = pneg %p64
      %p71 = scmp.eq.s32.totalorder %s13, 1
      %p72 = por %p70, %p71
      %p73 = scmp.ne.s32.totalorder %s65, %s68
      %p74 = scmp.eq.s32.totalorder %s13, 0
      %p75 = por %p73, %p74
      %p76 = scmp.ne.s32.totalorder %s65, %s68
      %p77 = scmp.eq.s32.totalorder %s18, 1
      %p78 = por %p76, %p77
      %p79 = scmp.ne.s32.totalorder %s68, %s69
      %p80 = scmp.eq.s32.totalorder %s18, 0
      %p81 = por %p79, %p80
      %p82 = scmp.ne.s32.totalorder %s68, %s69
      %p83 = scmp.eq.s32.totalorder %s19, 1
      %p84 = por %p82, %p83
      %p86 = scmp.ne.s32.totalorder %s69, %s85
      %p87 = scmp.eq.s32.totalorder %s19, 0
      %p88 = por %p86, %p87
      %p89 = scmp.le.s32.totalorder 1, %s13
      %p90 = scmp.lt.s32.totalorder %s13, 3
      %p91 = pnand %p89, %p90
      %p92 = pneg %p91
      // Predicated region
      $region9: #{tpu_custom_call.1} parent=5 // pred_check
        _
      $region10: #{tpu_custom_call.1} parent=5 // pred_check_branch
        %94 = sbr.rel (%p91) target = $region12
      $region11: #{tpu_custom_call.1} parent=5 // pred_region
        %s95 = ssub.s32 %s13, 1
      $region12: #{tpu_custom_call.1} parent=5 // pred_fallthru
        _
      %p96 = scmp.lt.s32.totalorder %s13, 2
      // Predicated region
      $region13: #{tpu_custom_call.1} parent=5 // pred_check
        %p97 = pneg %p96
      $region14: #{tpu_custom_call.1} parent=5 // pred_check_branch
        %99 = sbr.rel (%p97) target = $region16
      $region15: #{tpu_custom_call.1} parent=5 // pred_region
        // Predicated region
        $region17: #{tpu_custom_call.1} parent=15 // pred_check
          %p100 = pneg %p47
        $region18: #{tpu_custom_call.1} parent=15 // pred_check_branch
          %102 = sbr.rel (%p100) target = $region20
        $region19: #{tpu_custom_call.1} parent=15 // pred_region
          %s103 = sand.u32 %s37, 1
          %s104 = scalar_lea.sflag [#allocation3], %s103
          %s105 = sand.u32 %s37, 1
          %s106 = smul.addr %s105, 4
          %s107 = scalar_lea.vmem [#allocation2], %s106
          %s109 = ssub.s32 64, 64
          %110 = vsyncadd %s104, %s109
          %s111 = sadd.s32 %s21, %s20
          %s112 = smul.addr %s111, 64
          %s113 = scalar_lea.hbm %s0, %s112
          %s115 = sshll.u32 %s107, 4
          %s116 = int_to_ptr.vmem [resolvable:$true] %s115
          %118 = dma.hbm_to_vmem [thread:$0]  %s113, 64, %s116, %s104
        $region20: #{tpu_custom_call.1} parent=15 // pred_fallthru
          _
      $region16: #{tpu_custom_call.1} parent=5 // pred_fallthru
        _
      %p119 = scmp.le.s32.totalorder 1, %s13
      %p120 = scmp.lt.s32.totalorder %s13, 3
      %p121 = pnand %p119, %p120
      %p122 = pneg %p121
      // Predicated region
      $region21: #{tpu_custom_call.1} parent=5 // pred_check
        _
      $region22: #{tpu_custom_call.1} parent=5 // pred_check_branch
        %124 = sbr.rel (%p121) target = $region24
      $region23: #{tpu_custom_call.1} parent=5 // pred_region
        %s125 = ssub.s32 %s13, 1
        %s126 = sand.u32 %s40, 1
        %s127 = scalar_lea.sflag [#allocation3], %s126
        %s128 = sand.u32 %s40, 1
        %s129 = smul.addr %s128, 4
        %s130 = scalar_lea.vmem [#allocation2], %s129
        // Predicated region
        $region25: #{tpu_custom_call.1} parent=23 // pred_check
          %p131 = pneg %p53
        $region26: #{tpu_custom_call.1} parent=23 // pred_check_branch
          %133 = sbr.rel (%p131) target = $region28
        $region27: #{tpu_custom_call.1} parent=23 // pred_region
          %134 = dma.done %s127, 64
        $region28: #{tpu_custom_call.1} parent=23 // pred_fallthru
          _
        %s135 = sand.u32 %s40, 1
        %s136 = scalar_lea.sflag [#allocation3], %s135
        %s137 = sand.u32 %s40, 1
        %s138 = smul.addr %s137, 4
        %s139 = scalar_lea.vmem [#allocation2], %s138
        %p140 = pneg %p53
        %p141 = pneg %p50
        %p142 = pneg %p81
        %p143 = pneg %p78
        %s144 = sand.u32 %s68, 1
        %s145 = scalar_lea.sflag [#allocation4], %s144
        %s146 = sand.u32 %s68, 1
        %s147 = smul.addr %s146, 4
        %s148 = scalar_lea.vmem [#allocation5], %s147
        %s149 = smul.u32 %s23, 16
        %v150 = vlaneseq
        %v151 = vand.u32 %v150, 127
        %v152 = vstv %s149
        %v153 = vadd.s32 %v151, %v152
        %v154 = vlaneseq
        %v155 = vshrl.u32 %v154, 7
        %vm156 = vcmp.eq.s32.totalorder %v155, 1
        %v157 = vsel %vm156, 12, 16
        %vm158 = vcmp.eq.s32.totalorder %v155, 2
        %v159 = vsel %vm158, 10, %v157
        %vm160 = vcmp.eq.s32.totalorder %v155, 3
        %v161 = vsel %vm160, 8, %v159
        %vm162 = vcmp.ge.s32.totalorder %v153, %v161
        %v163 = vld [vmem:[%s130] sm:$0xf]
        %v164 = vsel %vm162, -inf, %v163
        %vm165 = vcmask 125952
        %166 = vst.msk [vmem:[%s148] sm:$0xf] %vm165, %v164
        %s167 = sand.u32 %s68, 1
        %s168 = scalar_lea.sflag [#allocation4], %s167
        %s169 = sand.u32 %s68, 1
        %s170 = smul.addr %s169, 4
        %s171 = scalar_lea.vmem [#allocation5], %s170
        // Predicated region
        $region29: #{tpu_custom_call.1} parent=23 // pred_check
          %p172 = pneg %p78
        $region30: #{tpu_custom_call.1} parent=23 // pred_check_branch
          %174 = sbr.rel (%p172) target = $region32
        $region31: #{tpu_custom_call.1} parent=23 // pred_region
          %s176 = ssub.s32 64, 64
          %177 = vsyncadd %s168, %s176
          %s178 = sadd.s32 %s23, %s22
          %s179 = smul.addr %s178, 64
          %s180 = scalar_lea.hbm %s1, %s179
          %s182 = sshll.u32 %s171, 4
          %s183 = int_to_ptr.vmem [resolvable:$true] %s182
          %185 = dma.vmem_to_hbm [thread:$0]  %s183, 64, %s180, %s168
        $region32: #{tpu_custom_call.1} parent=23 // pred_fallthru
          _
      $region24: #{tpu_custom_call.1} parent=5 // pred_fallthru
        _
      %p186 = scmp.le.s32.totalorder 2, %s13
      // Predicated region
      $region33: #{tpu_custom_call.1} parent=5 // pred_check
        %p187 = pneg %p186
      $region34: #{tpu_custom_call.1} parent=5 // pred_check_branch
        %189 = sbr.rel (%p187) target = $region36
      $region35: #{tpu_custom_call.1} parent=5 // pred_region
        %s190 = ssub.s32 %s13, 2
        // Predicated region
        $region37: #{tpu_custom_call.1} parent=35 // pred_check
          %p191 = pneg %p84
        $region38: #{tpu_custom_call.1} parent=35 // pred_check_branch
          %193 = sbr.rel (%p191) target = $region40
        $region39: #{tpu_custom_call.1} parent=35 // pred_region
          %s194 = sand.u32 %s69, 1
          %s195 = scalar_lea.sflag [#allocation4], %s194
          %s196 = sand.u32 %s69, 1
          %s197 = smul.addr %s196, 4
          %s198 = scalar_lea.vmem [#allocation5], %s197
          %199 = dma.done %s195, 64
        $region40: #{tpu_custom_call.1} parent=35 // pred_fallthru
          _
      $region36: #{tpu_custom_call.1} parent=5 // pred_fallthru
        _
    $region6: #{tpu_custom_call.1} parent=1 // loop_footer
      %s17 = sadd.s32 1, %s13
    $region7: #{tpu_custom_call.1} parent=1 // loop_footer_branch
      %12 = sbr.rel target = $region3
    $region8: #{tpu_custom_call.1} parent=1 // loop_exit
      _
    %200 = vsyncpa [#allocation3], 1
    %s201 = scalar_lea.sflag [#allocation3], 1
    %202 = vsyncpa %s201, 1
    %203 = vsyncpa [#allocation4], 1
    %s204 = scalar_lea.sflag [#allocation4], 1
    %205 = vsyncpa %s204, 1

</llo_original>
